<compile_context>
chip_gen: v6e
topology: v6e:2x2x1
jax: 0.10.0
libtpu: 0.0.40
codegen_flags: <defaults>
</compile_context>

<pallas_src>
import functools

import jax
import jax.numpy as jnp
from jax.experimental import pallas as pl
from jax.experimental.pallas import tpu as pltpu


_VMEM_LIMIT = 48 * 1024 * 1024   # explicit scoped-VMEM cap, safe on v5e/v6e/v7x


# ----------------------------------------------------------------------------
# Helpers: slab layout + tile sizing
# ----------------------------------------------------------------------------
def _ceil_div(a, b):
    return -(-a // b)


def _slab2d(a):
    """Copy-free reshape of a contiguous array to a dense 2-D slab.
    Preferred layout (M//128, 128): lane dim exactly one vreg wide and fully
    dense, sublane dim carries the bulk of the data (no sublane padding for
    any N*C)."""
    m = a.size
    if m % 128 == 0:
        return a.reshape(m // 128, 128)
    if a.ndim >= 2:                      # fallback: keep last dim on lanes
        return a.reshape(m // a.shape[-1], a.shape[-1])
    return a.reshape(1, m)


def _bce_row_tile(rows, cols):
    """Row (sublane) tile: ~4 MiB of lane-padded f32 per input block,
    multiple of 8; but keep >= ~4 tiles when the slab is big enough so the
    pipeline overlaps and v7x can split across both TensorCores."""
    lane_pad = _ceil_div(cols, 128) * 128
    rt = (4 * 1024 * 1024) // (lane_pad * 4)
    rt = max(8, (rt // 8) * 8)
    quarter = _ceil_div(_ceil_div(rows, 4), 8) * 8
    rt = min(rt, max(quarter, 8))
    return rows if rt >= rows else rt


def _ce_col_tile(num_classes, cols):
    """Lane tile for CE: ~8 MiB per (logits + sublane-padded int32 target)
    block pair, so the double-buffered working set stays well under the
    scoped-VMEM budget on every generation."""
    c_pad = _ceil_div(num_classes, 8) * 8
    tl = (8 * 1024 * 1024) // ((c_pad + 8) * 4)
    tl = max(128, (tl // 128) * 128)
    return cols if tl >= cols else tl


# ----------------------------------------------------------------------------
# Pallas kernels
# ----------------------------------------------------------------------------
def _bce_fused_kernel(xm_ref, ym_ref, xa_ref, ya_ref, main_ref, aux_ref, *,
                      n_rows, tile_rows, tiles_per_core, need_mask):
    # xm/ym: (tile_rows, L_main) main logits/targets block (native dtype)
    # xa/ya: full aux slab (single resident block)
    # main_ref/aux_ref: (1, 1, 1) f32 per-core partial sums
    c = pl.program_id(0)
    j = pl.program_id(1)

    @pl.when(j == 0)
    def _():
        main_ref[...] = jnp.zeros_like(main_ref)
        aux_ref[...] = jnp.zeros_like(aux_ref)

    x = xm_ref[...].astype(jnp.float32)
    y = ym_ref[...].astype(jnp.float32)
    # Numerically-stable BCE-with-logits (matches torch.nn.BCEWithLogitsLoss):
    #   max(x, 0) - x*y + log1p(exp(-|x|))
    loss = jnp.maximum(x, 0.0) - x * y + jnp.log1p(jnp.exp(-jnp.abs(x)))
    if need_mask:
        # Row-overhang of the last tile and duplicate (clamped) core slots.
        row0 = (c * tiles_per_core + j) * tile_rows
        row = row0 + jax.lax.broadcasted_iota(jnp.int32, loss.shape, 0)
        loss = jnp.where(row < n_rows, loss, 0.0)
    main_ref[...] += jnp.sum(loss).reshape(1, 1, 1)

    @pl.when((c == 0) & (j == 0))
    def _():
        ax = xa_ref[...].astype(jnp.float32)
        ay = ya_ref[...].astype(jnp.float32)
        al = jnp.maximum(ax, 0.0) - ax * ay + jnp.log1p(jnp.exp(-jnp.abs(ax)))
        aux_ref[...] = jnp.sum(al).reshape(1, 1, 1)


def _ce_partial_kernel(x_ref, t_ref, out_ref, *, n_cols, tile_cols, need_mask):
    # x_ref: (1, C, tile_cols) logits block (NCHW layout, H*W flattened on lanes)
    # t_ref: (1, 1, tile_cols) int32 targets block
    # out_ref: (1, 1, 1) f32 per-batch-row partial sum
    j = pl.program_id(1)

    @pl.when(j == 0)
    def _():
        out_ref[...] = jnp.zeros_like(out_ref)

    x = x_ref[0].astype(jnp.float32)          # (C, TL)
    t = t_ref[0]                              # (1, TL) int32
    m = jnp.max(x, axis=0, keepdims=True)
    lse = m + jnp.log(jnp.sum(jnp.exp(x - m), axis=0, keepdims=True))
    cls = jax.lax.broadcasted_iota(jnp.int32, x.shape, 0)
    picked = jnp.sum(jnp.where(cls == t, x, 0.0), axis=0, keepdims=True)
    loss = lse - picked                       # (1, TL)
    if need_mask:
        col = j * tile_cols + jax.lax.broadcasted_iota(jnp.int32, loss.shape, 1)
        loss = jnp.where(col < n_cols, loss, 0.0)
    out_ref[...] += jnp.sum(loss).reshape(1, 1, 1)


# ----------------------------------------------------------------------------
# Wrappers around pallas_call
# ----------------------------------------------------------------------------
def bce_main_aux_sums(main_logits, main_targets, aux_logits, aux_targets):
    """Returns (sum of per-element BCE over main slab, same over aux slab)
    from a single fused pallas_call."""
    xm, ym = _slab2d(main_logits), _slab2d(main_targets)
    xa, ya = _slab2d(aux_logits), _slab2d(aux_targets)
    rows_m, cols_m = xm.shape
    rows_a, cols_a = xa.shape

    rt = _bce_row_tile(rows_m, cols_m)
    num_tiles = _ceil_div(rows_m, rt)
    num_cores = 2 if num_tiles >= 2 else 1          # v7x megacore split
    tpc = _ceil_div(num_tiles, num_cores)
    need_mask = (num_cores * tpc * rt) != rows_m

    def main_map(c, j):
        # Clamp so padded core slots never index a fully out-of-bounds block;
        # their contribution is zeroed by the in-kernel row mask.
        return (jnp.minimum(c * tpc + j, num_tiles - 1), 0)

    out_main, out_aux = pl.pallas_call(
        functools.partial(_bce_fused_kernel, n_rows=rows_m, tile_rows=rt,
                          tiles_per_core=tpc, need_mask=need_mask),
        out_shape=(jax.ShapeDtypeStruct((num_cores, 1, 1), jnp.float32),
                   jax.ShapeDtypeStruct((num_cores, 1, 1), jnp.float32)),
        grid=(num_cores, tpc),
        in_specs=[
            pl.BlockSpec((rt, cols_m), main_map),
            pl.BlockSpec((rt, cols_m), main_map),
            pl.BlockSpec((rows_a, cols_a), lambda c, j: (0, 0)),
            pl.BlockSpec((rows_a, cols_a), lambda c, j: (0, 0)),
        ],
        out_specs=[
            pl.BlockSpec((1, 1, 1), lambda c, j: (c, 0, 0)),
            pl.BlockSpec((1, 1, 1), lambda c, j: (c, 0, 0)),
        ],
        compiler_params=pltpu.CompilerParams(
            dimension_semantics=("parallel", "arbitrary"),
            vmem_limit_bytes=_VMEM_LIMIT),
    )(xm, ym, xa, ya)
    return jnp.sum(out_main), jnp.sum(out_aux)


def ce_loss_pallas(logits, targets):
    """Mean softmax cross-entropy.  logits: (N, C, H, W); targets: (N, H, W)."""
    n, c, h, w = logits.shape
    L = h * w
    x = logits.reshape(n, c, L)                            # free reshape, NCHW kept
    t = targets.reshape(n, 1, L).astype(jnp.int32)

    tl = _ce_col_tile(c, L)
    num_tiles = _ceil_div(L, tl)
    need_mask = (L % tl) != 0

    out = pl.pallas_call(
        functools.partial(_ce_partial_kernel, n_cols=L, tile_cols=tl,
                          need_mask=need_mask),
        out_shape=jax.ShapeDtypeStruct((n, 1, 1), jnp.float32),
        grid=(n, num_tiles),
        in_specs=[
            pl.BlockSpec((1, c, tl), lambda i, j: (i, 0, j)),
            pl.BlockSpec((1, 1, tl), lambda i, j: (i, 0, j)),
        ],
        out_specs=pl.BlockSpec((1, 1, 1), lambda i, j: (i, 0, 0)),
        compiler_params=pltpu.CompilerParams(
            dimension_semantics=("parallel", "arbitrary"),
            vmem_limit_bytes=_VMEM_LIMIT),
    )(x, t)
    return jnp.sum(out) / (n * L)


def _bilinear_resize_align_corners(x, out_h, out_w):
    # x: (N, C, H, W) -> (N, C, out_h, out_w); matches
    # F.interpolate(mode='bilinear', align_corners=True).  Target prep is
    # under no_grad in the reference; done in plain JAX (glue).
    n, c, h, w = x.shape
    ys = (jnp.arange(out_h, dtype=jnp.float32) * (h - 1) / (out_h - 1)
          if out_h > 1 else jnp.zeros((out_h,), jnp.float32))
    xs = (jnp.arange(out_w, dtype=jnp.float32) * (w - 1) / (out_w - 1)
          if out_w > 1 else jnp.zeros((out_w,), jnp.float32))
    y0 = jnp.floor(ys).astype(jnp.int32)
    x0 = jnp.floor(xs).astype(jnp.int32)
    y1 = jnp.minimum(y0 + 1, h - 1)
    x1 = jnp.minimum(x0 + 1, w - 1)
    wy = (ys - y0.astype(jnp.float32))[:, None]            # (out_h, 1)
    wx = (xs - x0.astype(jnp.float32))[None, :]            # (1, out_w)
    ya0, ya1 = y0[:, None], y1[:, None]
    xa0, xa1 = x0[None, :], x1[None, :]
    v00 = x[:, :, ya0, xa0]          # single combined gather per corner
    v01 = x[:, :, ya0, xa1]
    v10 = x[:, :, ya1, xa0]
    v11 = x[:, :, ya1, xa1]
    return ((1.0 - wy) * (1.0 - wx) * v00 + (1.0 - wy) * wx * v01
            + wy * (1.0 - wx) * v10 + wy * wx * v11)


def pspnet_loss(logits, targets, alpha=0.4):
    """logits: tuple (main_out (N,C,H,W), aux_out (N,C,H/8,W/8)) or a single
    (N,C,H,W) array.  targets: (N,H,W)."""
    if isinstance(logits, tuple):
        main_out, aux_out = logits[0], logits[1]
        t = targets.astype(jnp.float32)
        if t.ndim < 4:
            t = t[:, None, :, :]
        aux_h, aux_w = aux_out.shape[-2], aux_out.shape[-1]
        aux_t = _bilinear_resize_align_corners(t, aux_h, aux_w)[:, 0:1, ...]
        # BCEWithLogitsLoss requires matching shapes (C must be 1 in the
        # reference); broadcast defensively if a caller passes C > 1.
        if t.shape != main_out.shape:
            t = jnp.broadcast_to(t, main_out.shape)
        if aux_t.shape != aux_out.shape:
            aux_t = jnp.broadcast_to(aux_t, aux_out.shape)
        main_sum, aux_sum = bce_main_aux_sums(main_out, t, aux_out, aux_t)
        main_loss = main_sum / main_out.size
        aux_loss = aux_sum / aux_out.size
        return main_loss + alpha * aux_loss
    else:
        return ce_loss_pallas(logits, targets)


# ----------------------------------------------------------------------------
# Plain-JAX references (for in-script correctness checks)
# ----------------------------------------------------------------------------
def _bce_ref(x, y):
    x = x.astype(jnp.float32)
    y = y.astype(jnp.float32)
    return jnp.mean(jnp.maximum(x, 0.0) - x * y + jnp.log1p(jnp.exp(-jnp.abs(x))))


def _ce_ref(logits, targets):
    t = targets.astype(jnp.int32)
    logp = jax.nn.log_softmax(logits.astype(jnp.float32), axis=1)
    picked = jnp.take_along_axis(logp, t[:, None, :, :], axis=1)[:, 0]
    return -jnp.mean(picked)


# ----------------------------------------------------------------------------
if __name__ == "__main__":
    key = jax.random.PRNGKey(0)
    k1, k2, k3, k4, k5 = jax.random.split(key, 5)

    # --- tuple branch (BCEWithLogits): C must be 1 for the reference to be
    #     well-formed (BCEWithLogitsLoss requires target.shape == input.shape).
    N, C, H, W = 2, 1, 16, 16
    main_out = jax.random.normal(k1, (N, C, H, W), jnp.float32)
    aux_out = jax.random.normal(k2, (N, C, H // 8, W // 8), jnp.float32)
    targets_bin = jax.random.bernoulli(k3, 0.5, (N, H, W)).astype(jnp.float32)

    loss_tuple = pspnet_loss((main_out, aux_out), targets_bin, alpha=0.4)
    loss_tuple = jax.block_until_ready(loss_tuple)

    # reference for the tuple branch
    t4 = targets_bin[:, None, :, :]
    aux_t4 = _bilinear_resize_align_corners(t4, H // 8, W // 8)[:, 0:1, ...]
    ref_tuple = _bce_ref(main_out, t4) + 0.4 * _bce_ref(aux_out, aux_t4)

    # --- non-tuple branch (cross-entropy)
    NC = 4
    ce_logits = jax.random.normal(k4, (N, NC, H, W), jnp.float32)
    ce_targets = jax.random.randint(k5, (N, H, W), 0, NC).astype(jnp.float32)

    loss_ce = pspnet_loss(ce_logits, ce_targets, alpha=0.4)
    loss_ce = jax.block_until_ready(loss_ce)
    ref_ce = _ce_ref(ce_logits, ce_targets)

    assert bool(jnp.isfinite(loss_tuple)) and bool(jnp.isfinite(loss_ce))
    assert abs(float(loss_tuple) - float(ref_tuple)) < 1e-4, (loss_tuple, ref_tuple)
    assert abs(float(loss_ce) - float(ref_ce)) < 1e-4, (loss_ce, ref_ce)
    print("KERNEL_OK")
</pallas_src>

<mosaic_0001>
module attributes {stable_mosaic.version = 11 : i64} {
  func.func @_bce_fused_kernel(%arg0: i32, %arg1: i32, %arg2: memref<4x128xf32, #tpu.memory_space<vmem>>, %arg3: memref<4x128xf32, #tpu.memory_space<vmem>>, %arg4: memref<4x2xf32, #tpu.memory_space<vmem>>, %arg5: memref<4x2xf32, #tpu.memory_space<vmem>>, %arg6: memref<1x1x1xf32, #tpu.memory_space<vmem>>, %arg7: memref<1x1x1xf32, #tpu.memory_space<vmem>>) attributes {dimension_semantics = [#tpu.dimension_semantics<parallel>, #tpu.dimension_semantics<arbitrary>], iteration_bounds = array<i64: 1, 1>, scalar_prefetch = 0 : i64, scratch_operands = 0 : i64, tpu.core_type = #tpu.core_type<tc>, window_params = [{transform_indices = @transform_0, window_bounds = array<i64: 4, 128>}, {transform_indices = @transform_1, window_bounds = array<i64: 4, 128>}, {pipeline_mode = #tpu.pipeline_mode<synchronous>, transform_indices = @transform_2, window_bounds = array<i64: 4, 2>}, {pipeline_mode = #tpu.pipeline_mode<synchronous>, transform_indices = @transform_3, window_bounds = array<i64: 4, 2>}, {transform_indices = @transform_4, window_bounds = array<i64: 1, 1, 1>}, {transform_indices = @transform_5, window_bounds = array<i64: 1, 1, 1>}]} {
    %c0_i32 = arith.constant 0 : i32
    %0 = arith.cmpi eq, %arg1, %c0_i32 : i32
    %1 = arith.extui %0 : i1 to i32
    %c0_i32_0 = arith.constant 0 : i32
    %2 = arith.cmpi ne, %1, %c0_i32_0 : i32
    scf.if %2 {
      %cst_15 = arith.constant 0.000000e+00 : f32
      %28 = vector.broadcast %cst_15 : f32 to vector<1x1x1xf32>
      %c0_16 = arith.constant 0 : index
      %c0_17 = arith.constant 0 : index
      %c0_18 = arith.constant 0 : index
      %29 = vector.load %arg6[%c0_16, %c0_17, %c0_18] : memref<1x1x1xf32, #tpu.memory_space<vmem>>, vector<1x1x1xf32>
      tpu.vector_store %arg6[%c0_16, %c0_17, %c0_18], %28 {strides = array<i32>} : memref<1x1x1xf32, #tpu.memory_space<vmem>>, vector<1x1x1xf32>,
      %cst_19 = arith.constant 0.000000e+00 : f32
      %30 = vector.broadcast %cst_19 : f32 to vector<1x1x1xf32>
      %c0_20 = arith.constant 0 : index
      %c0_21 = arith.constant 0 : index
      %c0_22 = arith.constant 0 : index
      %31 = vector.load %arg7[%c0_20, %c0_21, %c0_22] : memref<1x1x1xf32, #tpu.memory_space<vmem>>, vector<1x1x1xf32>
      tpu.vector_store %arg7[%c0_20, %c0_21, %c0_22], %30 {strides = array<i32>} : memref<1x1x1xf32, #tpu.memory_space<vmem>>, vector<1x1x1xf32>,
    } else {
    }
    %c0 = arith.constant 0 : index
    %c0_1 = arith.constant 0 : index
    %3 = vector.load %arg2[%c0, %c0_1] : memref<4x128xf32, #tpu.memory_space<vmem>>, vector<4x128xf32>
    %c0_2 = arith.constant 0 : index
    %c0_3 = arith.constant 0 : index
    %4 = vector.load %arg3[%c0_2, %c0_3] : memref<4x128xf32, #tpu.memory_space<vmem>>, vector<4x128xf32>
    %cst = arith.constant 0.000000e+00 : f32
    %5 = vector.broadcast %cst : f32 to vector<4x128xf32>
    %6 = arith.maximumf %3, %5 : vector<4x128xf32>
    %7 = arith.mulf %3, %4 : vector<4x128xf32>
    %8 = arith.subf %6, %7 : vector<4x128xf32>
    %9 = math.absf %3 : vector<4x128xf32>
    %cst_4 = arith.constant 0.000000e+00 : f32
    %10 = vector.broadcast %cst_4 : f32 to vector<4x128xf32>
    %11 = arith.subf %10, %9 : vector<4x128xf32>
    %12 = math.exp %11 : vector<4x128xf32>
    %13 = math.log1p %12 : vector<4x128xf32>
    %14 = arith.addf %8, %13 : vector<4x128xf32>
    %c0_5 = arith.constant 0 : index
    %c0_6 = arith.constant 0 : index
    %c0_7 = arith.constant 0 : index
    %15 = vector.load %arg6[%c0_5, %c0_6, %c0_7] : memref<1x1x1xf32, #tpu.memory_space<vmem>>, vector<1x1x1xf32>
    %16 = vector.shape_cast %14 : vector<4x128xf32> to vector<1x4x128xf32>
    %cst_8 = arith.constant dense<0.000000e+00> : vector<1xf32>
    %17 = vector.multi_reduction <add>, %16, %cst_8 [1, 2] : vector<1x4x128xf32> to vector<1xf32>
    %18 = vector.shape_cast %17 : vector<1xf32> to vector<1x1x1xf32>
    %19 = vector.extract %18[0, 0, 0] : f32 from vector<1x1x1xf32>
    %20 = vector.broadcast %19 : f32 to vector<1x1x1xf32>
    %21 = arith.addf %15, %20 : vector<1x1x1xf32>
    %c0_9 = arith.constant 0 : index
    %c0_10 = arith.constant 0 : index
    %c0_11 = arith.constant 0 : index
    %22 = vector.load %arg6[%c0_9, %c0_10, %c0_11] : memref<1x1x1xf32, #tpu.memory_space<vmem>>, vector<1x1x1xf32>
    tpu.vector_store %arg6[%c0_9, %c0_10, %c0_11], %21 {strides = array<i32>} : memref<1x1x1xf32, #tpu.memory_space<vmem>>, vector<1x1x1xf32>,
    %c0_i32_12 = arith.constant 0 : i32
    %23 = arith.cmpi eq, %arg0, %c0_i32_12 : i32
    %c0_i32_13 = arith.constant 0 : i32
    %24 = arith.cmpi eq, %arg1, %c0_i32_13 : i32
    %25 = arith.andi %23, %24 : i1
    %26 = arith.extui %25 : i1 to i32
    %c0_i32_14 = arith.constant 0 : i32
    %27 = arith.cmpi ne, %26, %c0_i32_14 : i32
    scf.if %27 {
      %c0_15 = arith.constant 0 : index
      %c0_16 = arith.constant 0 : index
      %28 = vector.load %arg4[%c0_15, %c0_16] : memref<4x2xf32, #tpu.memory_space<vmem>>, vector<4x2xf32>
      %c0_17 = arith.constant 0 : index
      %c0_18 = arith.constant 0 : index
      %29 = vector.load %arg5[%c0_17, %c0_18] : memref<4x2xf32, #tpu.memory_space<vmem>>, vector<4x2xf32>
      %cst_19 = arith.constant 0.000000e+00 : f32
      %30 = vector.broadcast %cst_19 : f32 to vector<4x2xf32>
      %31 = arith.maximumf %28, %30 : vector<4x2xf32>
      %32 = arith.mulf %28, %29 : vector<4x2xf32>
      %33 = arith.subf %31, %32 : vector<4x2xf32>
      %34 = math.absf %28 : vector<4x2xf32>
      %cst_20 = arith.constant 0.000000e+00 : f32
      %35 = vector.broadcast %cst_20 : f32 to vector<4x2xf32>
      %36 = arith.subf %35, %34 : vector<4x2xf32>
      %37 = math.exp %36 : vector<4x2xf32>
      %38 = math.log1p %37 : vector<4x2xf32>
      %39 = arith.addf %33, %38 : vector<4x2xf32>
      %40 = vector.shape_cast %39 : vector<4x2xf32> to vector<1x4x2xf32>
      %cst_21 = arith.constant dense<0.000000e+00> : vector<1xf32>
      %41 = vector.multi_reduction <add>, %40, %cst_21 [1, 2] : vector<1x4x2xf32> to vector<1xf32>
      %42 = vector.shape_cast %41 : vector<1xf32> to vector<1x1x1xf32>
      %43 = vector.extract %42[0, 0, 0] : f32 from vector<1x1x1xf32>
      %44 = vector.broadcast %43 : f32 to vector<1x1x1xf32>
      %c0_22 = arith.constant 0 : index
      %c0_23 = arith.constant 0 : index
      %c0_24 = arith.constant 0 : index
      %45 = vector.load %arg7[%c0_22, %c0_23, %c0_24] : memref<1x1x1xf32, #tpu.memory_space<vmem>>, vector<1x1x1xf32>
      tpu.vector_store %arg7[%c0_22, %c0_23, %c0_24], %44 {strides = array<i32>} : memref<1x1x1xf32, #tpu.memory_space<vmem>>, vector<1x1x1xf32>,
    } else {
    }
    return
  }
  func.func @transform_0(%arg0: i32, %arg1: i32) -> (i32, i32) {
    %c1_i32 = arith.constant 1 : i32
    %0 = arith.muli %arg0, %c1_i32 : i32
    %1 = arith.addi %0, %arg1 : i32
    %c0_i32 = arith.constant 0 : i32
    %2 = arith.minsi %1, %c0_i32 : i32
    %c0_i32_0 = arith.constant 0 : i32
    %c0_i32_1 = arith.constant 0 : i32
    return %2, %c0_i32_0 : i32, i32
  }
  func.func @transform_1(%arg0: i32, %arg1: i32) -> (i32, i32) {
    %c1_i32 = arith.constant 1 : i32
    %0 = arith.muli %arg0, %c1_i32 : i32
    %1 = arith.addi %0, %arg1 : i32
    %c0_i32 = arith.constant 0 : i32
    %2 = arith.minsi %1, %c0_i32 : i32
    %c0_i32_0 = arith.constant 0 : i32
    %c0_i32_1 = arith.constant 0 : i32
    return %2, %c0_i32_0 : i32, i32
  }
  func.func @transform_2(%arg0: i32, %arg1: i32) -> (i32, i32) {
    %c0_i32 = arith.constant 0 : i32
    %c0_i32_0 = arith.constant 0 : i32
    %c0_i32_1 = arith.constant 0 : i32
    return %c0_i32, %c0_i32_0 : i32, i32
  }
  func.func @transform_3(%arg0: i32, %arg1: i32) -> (i32, i32) {
    %c0_i32 = arith.constant 0 : i32
    %c0_i32_0 = arith.constant 0 : i32
    %c0_i32_1 = arith.constant 0 : i32
    return %c0_i32, %c0_i32_0 : i32, i32
  }
  func.func @transform_4(%arg0: i32, %arg1: i32) -> (i32, i32, i32) {
    %c0_i32 = arith.constant 0 : i32
    %c0_i32_0 = arith.constant 0 : i32
    %c0_i32_1 = arith.constant 0 : i32
    return %arg0, %c0_i32, %c0_i32_0 : i32, i32, i32
  }
  func.func @transform_5(%arg0: i32, %arg1: i32) -> (i32, i32, i32) {
    %c0_i32 = arith.constant 0 : i32
    %c0_i32_0 = arith.constant 0 : i32
    %c0_i32_1 = arith.constant 0 : i32
    return %arg0, %c0_i32, %c0_i32_0 : i32, i32, i32
  }
}

</mosaic_0001>

<llo_original>
// kernel: tpu_custom_call.1
$region0: #{tpu_custom_call.1}
  #allocation0 [shape = 'u32[]', space=smem, size = 0x4, offset = 0x4, fixed_abs, tag = 'smem constant byte address 0x4 - core index']
  #allocation1 [shape = 'u32[144,128]{1,0:T(1,128)}', space=vmem, size = 0x12000, scoped, tag = 'internal scratch']
  %s0 = inlined_call_operand.vmem [shape: f32[4,128], index: 0, kind: input, shape index: {}]
  %s1 = inlined_call_operand.vmem [shape: f32[4,128], index: 1, kind: input, shape index: {}]
  %s2 = inlined_call_operand.vmem [shape: f32[4,2], index: 2, kind: input, shape index: {}]
  %s3 = inlined_call_operand.vmem [shape: f32[4,2], index: 3, kind: input, shape index: {}]
  %s4 = inlined_call_operand.hbm [shape: f32[1,1,1], index: 4, kind: output, shape index: {0}]
  %s5 = inlined_call_operand.hbm [shape: f32[1,1,1], index: 5, kind: output, shape index: {1}]
  %6 = xla_tuple %s4, %s5
  %s7 = sld [smem:[#allocation0]]
  $region42: #{tpu_custom_call.1} parent=0
    _
  %s9 = ssub.s32 1, %s7
  %s10 = scalar_select 0, %s9, %s7
  $region1: #{tpu_custom_call.1} parent=0
    #allocation2 [shape = 'u8[512]{0}', space=vmem, size = 0x400, scoped, tag = 'output window, operand 0, single buffered']
    #allocation3 [shape = 's32[1]{0}', space=sflag, size = 0x4, scoped, tag = 'scoped memory for tpu_custom_call.1']
    #allocation4 [shape = 'u8[512]{0}', space=vmem, size = 0x400, scoped, tag = 'output window, operand 1, single buffered']
    #allocation5 [shape = 's32[1]{0}', space=sflag, size = 0x4, scoped, tag = 'scoped memory for tpu_custom_call.1']
    %11 = vsyncpa [#allocation3], 0
    %12 = vsyncpa [#allocation5], 0
    // Predicated region
    $region2: #{tpu_custom_call.1} parent=1 // pred_check
      _
    $region3: #{tpu_custom_call.1} parent=1 // pred_check_branch
      %14 = sbr.rel (0) target = $region5
    $region4: #{tpu_custom_call.1} parent=1 // pred_region
      %s15 = sadd.s32 0, 0
      %p16 = scmp.lt.s32.totalorder %s15, 0
      %s17 = scalar_select %p16, %s15, 0
      %p18 = scmp.lt.s32.totalorder %s17, 0
      %s19 = scalar_select %p18, %s17, 0
      %s20 = smul.addr %s19, 4
      %s21 = scalar_lea.vmem %s0, %s20
      %s22 = sadd.s32 0, 0
      %p23 = scmp.lt.s32.totalorder %s22, 0
      %s24 = scalar_select %p23, %s22, 0
    $region5: #{tpu_custom_call.1} parent=1 // pred_fallthru
      _
    // Predicated region
    $region6: #{tpu_custom_call.1} parent=1 // pred_check
      _
    $region7: #{tpu_custom_call.1} parent=1 // pred_check_branch
      %26 = sbr.rel (0) target = $region9
    $region8: #{tpu_custom_call.1} parent=1 // pred_region
      %s27 = sadd.s32 0, 0
      %p28 = scmp.lt.s32.totalorder %s27, 0
      %s29 = scalar_select %p28, %s27, 0
      %p30 = scmp.lt.s32.totalorder %s29, 0
      %s31 = scalar_select %p30, %s29, 0
      %s32 = smul.addr %s31, 4
      %s33 = scalar_lea.vmem %s1, %s32
      %s34 = sadd.s32 0, 0
      %p35 = scmp.lt.s32.totalorder %s34, 0
      %s36 = scalar_select %p35, %s34, 0
    $region9: #{tpu_custom_call.1} parent=1 // pred_fallthru
      _
    // Predicated region
    $region10: #{tpu_custom_call.1} parent=1 // pred_check
      _
    $region11: #{tpu_custom_call.1} parent=1 // pred_check_branch
      %38 = sbr.rel (0) target = $region13
    $region12: #{tpu_custom_call.1} parent=1 // pred_region
      _
    $region13: #{tpu_custom_call.1} parent=1 // pred_fallthru
      _
    // Predicated region
    $region14: #{tpu_custom_call.1} parent=1 // pred_check
      _
    $region15: #{tpu_custom_call.1} parent=1 // pred_check_branch
      %40 = sbr.rel (0) target = $region17
    $region16: #{tpu_custom_call.1} parent=1 // pred_region
      _
    $region17: #{tpu_custom_call.1} parent=1 // pred_fallthru
      _
    %s41 = sadd.s32 0, 0
    %p42 = scmp.lt.s32.totalorder %s41, 0
    %s43 = scalar_select %p42, %s41, 0
    %p44 = scmp.lt.s32.totalorder %s43, 0
    %s45 = scalar_select %p44, %s43, 0
    %s46 = smul.addr %s45, 4
    %s47 = scalar_lea.vmem %s0, %s46
    %s48 = sadd.s32 0, 0
    %p49 = scmp.lt.s32.totalorder %s48, 0
    %s50 = scalar_select %p49, %s48, 0
    %p51 = scmp.lt.s32.totalorder %s50, 0
    %s52 = scalar_select %p51, %s50, 0
    %s53 = smul.addr %s52, 4
    %s54 = scalar_lea.vmem %s1, %s53
    %s55 = sadd.s32 0, 0
    %p56 = scmp.lt.s32.totalorder %s55, 0
    %s57 = scalar_select %p56, %s55, 0
    %p58 = scmp.lt.s32.totalorder %s57, 0
    %s59 = scalar_select %p58, %s57, 0
    %s60 = smul.addr %s59, 4
    %s61 = scalar_lea.vmem %s0, %s60
    %s62 = sadd.s32 0, 0
    %p63 = scmp.lt.s32.totalorder %s62, 0
    %s64 = scalar_select %p63, %s62, 0
    %s65 = sadd.s32 0, 0
    %p66 = scmp.lt.s32.totalorder %s65, 0
    %s67 = scalar_select %p66, %s65, 0
    %p68 = scmp.lt.s32.totalorder %s67, 0
    %s69 = scalar_select %p68, %s67, 0
    %s70 = smul.addr %s69, 4
    %s71 = scalar_lea.vmem %s1, %s70
    %s72 = sadd.s32 0, 0
    %p73 = scmp.lt.s32.totalorder %s72, 0
    %s74 = scalar_select %p73, %s72, 0
    %p75 = scmp.eq.s32.totalorder 0, 0
    // Predicated region
    $region18: #{tpu_custom_call.1} parent=1 // pred_check
      %p76 = pneg %p75
    $region19: #{tpu_custom_call.1} parent=1 // pred_check_branch
      %78 = sbr.rel (%p76) target = $region21
    $region20: #{tpu_custom_call.1} parent=1 // pred_region
      %vm79 = vcmask 0
      %80 = vst.msk [vmem:[#allocation2] sm:$0x1] %vm79, 0.0
      %81 = vst.msk [vmem:[#allocation4] sm:$0x1] %vm79, 0.0
    $region21: #{tpu_custom_call.1} parent=1 // pred_fallthru
      _
    %v82 = vld [vmem:[%s61] sm:$0xf]
    %v83 = vld [vmem:[%s71] sm:$0xf]
    %v84 = vmax.f32 %v82, 0.0
    %v85 = vmul.f32 %v82, %v83
    %v86 = vsub.f32 %v84, %v85
    %v87 = vand.u32 2147483647, %v82
    %v88 = vsub.f32 0.0, %v87
    %v89 = vmul.f32 %v88, 1.442695
    %v90 = vpow.pop %v89
    %v91 = vadd.f32 %v90, 1.0
    %v92 = vlog2.pop %v91
    %v93 = vmul.f32 %v92, 0.6931472
    %v94 = vmul.f32 -0.5, %v90
    %v95 = vadd.f32 %v94, 1.0
    %v96 = vmul.f32 %v95, %v90
    %v97 = vand.u32 2147483647, %v90
    %vm98 = vcmp.lt.f32.partialorder %v97, 0.0004427343
    %v99 = vsel %vm98, %v96, %v93
    %v100 = vadd.f32 %v86, %v99
    %v101 = vld [vmem:[#allocation2] sm:$0x1]
    %vm102 = vcmask 1043456
    %v103 = vsel %vm102, %v100, 0.0
    %104 = vadd.xlane.f32.xlu0 %v103
    %v105 = vpop.xlane.xlu0 %104
    %v106 = vrot.slane %v105, 4
    %v107 = vadd.f32 %v105, %v106
    %v108 = vrot.slane %v107, 2
    %v109 = vadd.f32 %v107, %v108
    %v110 = vrot.slane %v109, 1
    %v111 = vadd.f32 %v109, %v110
    %s112 = vtos %v111
    %v113 = vstv %s112
    %v114 = vadd.f32 %v101, %v113
    %vm115 = vcmask 0
    %116 = vst.msk [vmem:[#allocation2] sm:$0x1] %vm115, %v114
    %p117 = scmp.eq.s32.totalorder 0, 0
    %p118 = pnand %p117, %p75
    %p119 = pneg %p118
    // Predicated region
    $region22: #{tpu_custom_call.1} parent=1 // pred_check
      _
    $region23: #{tpu_custom_call.1} parent=1 // pred_check_branch
      %121 = sbr.rel (%p118) target = $region25
    $region24: #{tpu_custom_call.1} parent=1 // pred_region
      %v122 = vld [vmem:[%s2] sm:$0xf]
      %v123 = vld [vmem:[%s3] sm:$0xf]
      %v124 = vmax.f32 %v122, 0.0
      %v125 = vmul.f32 %v122, %v123
      %v126 = vsub.f32 %v124, %v125
      %v127 = vand.u32 2147483647, %v122
      %v128 = vsub.f32 0.0, %v127
      %v129 = vmul.f32 %v128, 1.442695
      %v130 = vpow.pop %v129
      %v131 = vadd.f32 %v130, 1.0
      %v132 = vlog2.pop %v131
      %v133 = vmul.f32 %v132, 0.6931472
      %v134 = vmul.f32 -0.5, %v130
      %v135 = vadd.f32 %v134, 1.0
      %v136 = vmul.f32 %v135, %v130
      %v137 = vand.u32 2147483647, %v130
      %vm138 = vcmp.lt.f32.partialorder %v137, 0.0004427343
      %v139 = vsel %vm138, %v136, %v133
      %v140 = vadd.f32 %v126, %v139
      %vm141 = vcmask 11264
      %v142 = vsel %vm141, %v140, 0.0
      %143 = vadd.xlane.f32.xlu0 %v142
      %v144 = vpop.xlane.xlu0 %143
      %v145 = vrot.slane %v144, 4
      %v146 = vadd.f32 %v144, %v145
      %v147 = vrot.slane %v146, 2
      %v148 = vadd.f32 %v146, %v147
      %v149 = vrot.slane %v148, 1
      %v150 = vadd.f32 %v148, %v149
      %s151 = vtos %v150
      %v152 = vstv %s151
      %153 = vst.msk [vmem:[#allocation4] sm:$0x1] %vm115, %v152
    $region25: #{tpu_custom_call.1} parent=1 // pred_fallthru
      _
    // Predicated region
    $region26: #{tpu_custom_call.1} parent=1 // pred_check
      _
    $region27: #{tpu_custom_call.1} parent=1 // pred_check_branch
      %155 = sbr.rel (0) target = $region29
    $region28: #{tpu_custom_call.1} parent=1 // pred_region
      %s157 = ssub.s32 16, 16
      %158 = vsyncadd [#allocation3], %s157
      %s160 = sshll.u32 [#allocation2], 4
      %s161 = int_to_ptr.vmem [resolvable:$true] %s160
      %163 = dma.vmem_to_hbm [thread:$0]  %s161, 16, %s4, [#allocation3]
    $region29: #{tpu_custom_call.1} parent=1 // pred_fallthru
      _
    // Predicated region
    $region30: #{tpu_custom_call.1} parent=1 // pred_check
      _
    $region31: #{tpu_custom_call.1} parent=1 // pred_check_branch
      %165 = sbr.rel (0) target = $region33
    $region32: #{tpu_custom_call.1} parent=1 // pred_region
      %s167 = ssub.s32 16, 16
      %168 = vsyncadd [#allocation5], %s167
      %s170 = sshll.u32 [#allocation4], 4
      %s171 = int_to_ptr.vmem [resolvable:$true] %s170
      %173 = dma.vmem_to_hbm [thread:$0]  %s171, 16, %s5, [#allocation5]
    $region33: #{tpu_custom_call.1} parent=1 // pred_fallthru
      _
    // Predicated region
    $region34: #{tpu_custom_call.1} parent=1 // pred_check
      _
    $region35: #{tpu_custom_call.1} parent=1 // pred_check_branch
      %175 = sbr.rel (0) target = $region37
    $region36: #{tpu_custom_call.1} parent=1 // pred_region
      %176 = dma.done [#allocation3], 16
    $region37: #{tpu_custom_call.1} parent=1 // pred_fallthru
      _
    // Predicated region
    $region38: #{tpu_custom_call.1} parent=1 // pred_check
      _
    $region39: #{tpu_custom_call.1} parent=1 // pred_check_branch
      %178 = sbr.rel (0) target = $region41
    $region40: #{tpu_custom_call.1} parent=1 // pred_region
      %179 = dma.done [#allocation5], 16
    $region41: #{tpu_custom_call.1} parent=1 // pred_fallthru
      _
    %180 = vsyncpa [#allocation3], 1
    %181 = vsyncpa [#allocation5], 1

</llo_original>
